<compile_context>
chip_gen: v6e
topology: v6e:2x2x1
jax: 0.10.0
libtpu: 0.0.40
codegen_flags: <defaults>
</compile_context>

<pallas_src>
import jax
import jax.numpy as jnp
from jax.experimental import pallas as pl
from jax.experimental.pallas import tpu as pltpu


# ---------------------------------------------------------------------------
# Kernel
# ---------------------------------------------------------------------------
def dcn_kernel(x0_ref, wm_ref, b1_ref, w2_ref, b2_ref, wpd_ref, const_ref,
               out_ref):
    # x0_ref: (D, TB) stream dtype -- features on sublanes, batch on lanes
    #         (lane-dense; output block is lane-dense too -> unmasked vst).
    x0 = x0_ref[...]

    # Single stacked matmul against the streamed tile:
    #   row 0      : w_cross_last        -> proj       = x0 . w_last
    #   row 1      : w_predict_cross     -> cross_dot  = x0 . wpc
    #   rows 8:8+H1: BN0-folded w1'      -> first deep linear (pre-bias)
    m = jnp.dot(wm_ref[...], x0, preferred_element_type=jnp.float32)  # (R, TB)
    proj = m[0:1, :]
    cross_dot = m[1:2, :]

    h1_rows = b1_ref.shape[0]                                         # H1
    h = jnp.maximum(m[8:8 + h1_rows, :] + b1_ref[...], 0.0)           # (H1, TB)
    # TODO(synk): training-mode dropout masking / batch-statistic BN not modeled.
    h2 = jnp.dot(w2_ref[...], h.astype(w2_ref.dtype),
                 preferred_element_type=jnp.float32) + b2_ref[...]    # (H2, TB)
    h2 = jnp.maximum(h2, 0.0)
    deep_dot = jnp.sum(h2 * wpd_ref[...], axis=0, keepdims=True)      # (1, TB)

    # cross branch folded:  sum(cross*wpc) = (proj+1)*cross_dot + b_last*sum(wpc)
    # const (SMEM scalar)   = b_last*sum(wpc) + bp + sum(t2*wpd)   [BN2 fold]
    logit = (proj + 1.0) * cross_dot + deep_dot + const_ref[0]
    out_ref[...] = jax.nn.sigmoid(logit).astype(out_ref.dtype)        # (1, TB)


# ---------------------------------------------------------------------------
# Host-side folds & wrapper
# ---------------------------------------------------------------------------
def _round_up(x, m):
    return (x + m - 1) // m * m


def _choose_batch_tile(B, tb_max, min_steps):
    """Multiple-of-128 batch tile; shrunk to keep >= min_steps grid steps so
    both v7x TensorCores get work, capped at tb_max (safe for v5e's 16 MiB
    default scoped VMEM even with f32 streaming)."""
    assert tb_max % 128 == 0
    cap = min(tb_max, _round_up(B, 128))
    target = _round_up(-(-B // min_steps), 128)
    return max(128, min(cap, target))


def _fold_params(params, stream_dtype):
    (wc, bc, s0, t0, w1, b1, s1, t1, w2, b2, s2, t2, wpc, wpd, bp) = params
    D, H1 = w1.shape
    H2 = w2.shape[1]

    # BatchNorm folds (exact algebra, eval-mode running stats):
    w1f = w1 * s0.T                      # (D, H1)   BN0 -> linear1
    b1f = b1 + t0 @ w1                   # (1, H1)
    w2f = w2 * s1.T                      # (H1, H2)  BN1 -> linear2
    b2f = b2 + t1 @ w2                   # (1, H2)
    wpdf = wpd * s2                      # (1, H2)   BN2 -> predict deep weights
    const = bc[-1, 0] * jnp.sum(wpc) + bp[0, 0] + jnp.sum(t2 * wpd)

    # Stacked first-matmul weight.  Only the LAST cross layer is live (the
    # module overwrites `emb` every loop iteration).  Rows padded to a
    # multiple of 16 so bf16 sublane packing is native; deep rows start at 8
    # so the (H1, TB) slice stays (8,128)-tile aligned.
    n_rows = _round_up(8 + H1, 16)
    wm = jnp.zeros((n_rows, D), jnp.float32)
    wm = wm.at[0, :].set(wc[-1, :])          # w_cross_last
    wm = wm.at[1, :].set(wpc[0, :])          # w_predict_cross
    wm = wm.at[8:8 + H1, :].set(w1f.T)       # BN0-folded first deep linear
    wm = wm.astype(stream_dtype)

    b1c = b1f.T.astype(jnp.float32)          # (H1, 1)
    w2t = w2f.T.astype(stream_dtype)         # (H2, H1)
    b2c = b2f.T.astype(jnp.float32)          # (H2, 1)
    wpdc = wpdf.T.astype(jnp.float32)        # (H2, 1)
    constv = const.reshape(1).astype(jnp.float32)
    return wm, b1c, w2t, b2c, wpdc, constv


def dcn_forward_pallas(x0t, params, *, tb_max=8192, min_grid_steps=4):
    """x0t: [D, B] feature-major activations (f32 or bf16) -> [B, 1] f32."""
    D, B = x0t.shape
    assert x0t.dtype in (jnp.float32, jnp.bfloat16)
    stream_dtype = x0t.dtype
    wm, b1c, w2t, b2c, wpdc, constv = _fold_params(params, stream_dtype)
    assert wm.shape[1] == D

    tb = _choose_batch_tile(B, tb_max, min_grid_steps)
    grid = (pl.cdiv(B, tb),)                 # last block may be partially OOB:
                                             # garbage lanes in, writes dropped.
    vmem_params = (wm, b1c, w2t, b2c, wpdc)

    def _full(arr):
        return pl.BlockSpec(arr.shape, lambda i, _nd=arr.ndim: (0,) * _nd)

    in_specs = ([pl.BlockSpec((D, tb), lambda i: (0, i))]
                + [_full(p) for p in vmem_params]
                + [pl.BlockSpec(memory_space=pltpu.MemorySpace.SMEM)])
    out_spec = pl.BlockSpec((1, tb), lambda i: (0, i))

    out = pl.pallas_call(
        dcn_kernel,
        out_shape=jax.ShapeDtypeStruct((1, B), jnp.float32),
        grid_spec=pltpu.PrefetchScalarGridSpec(
            num_scalar_prefetch=0,
            grid=grid,
            in_specs=in_specs,
            out_specs=out_spec,
        ),
        compiler_params=pltpu.CompilerParams(
            dimension_semantics=("parallel",)),
    )(x0t, *vmem_params, constv)
    return out[0, :][:, None]


# ---------------------------------------------------------------------------
# Parameter construction, XLA glue, and plain-JAX reference
# ---------------------------------------------------------------------------
def make_params(key, emb_dim, cross_layer_num, sparse_dim_dict, dense_dim,
                hidden_dims):
    n_sparse = len(sparse_dim_dict)
    D = n_sparse * emb_dim + dense_dim
    H1, H2 = hidden_dims
    eps = 1e-5
    k = iter(jax.random.split(key, n_sparse + 14))

    emb_tables = [
        0.1 * jax.random.normal(next(k), (vocab, emb_dim), jnp.float32)
        for vocab in sparse_dim_dict.values()
    ]

    wc = 0.1 * jax.random.normal(next(k), (cross_layer_num, D), jnp.float32)
    bc = 0.1 * jax.random.normal(next(k), (cross_layer_num, 1), jnp.float32)

    def bn_fold(key_g, key_b, dim):
        gamma = 1.0 + 0.1 * jax.random.normal(key_g, (1, dim), jnp.float32)
        beta = 0.1 * jax.random.normal(key_b, (1, dim), jnp.float32)
        mean = jnp.zeros((1, dim), jnp.float32)
        var = jnp.ones((1, dim), jnp.float32)
        scale = gamma / jnp.sqrt(var + eps)
        shift = beta - mean * scale
        return scale, shift

    s0, t0 = bn_fold(next(k), next(k), D)
    w1 = 0.1 * jax.random.normal(next(k), (D, H1), jnp.float32)
    b1 = 0.1 * jax.random.normal(next(k), (1, H1), jnp.float32)
    s1, t1 = bn_fold(next(k), next(k), H1)
    w2 = 0.1 * jax.random.normal(next(k), (H1, H2), jnp.float32)
    b2 = 0.1 * jax.random.normal(next(k), (1, H2), jnp.float32)
    s2, t2 = bn_fold(next(k), next(k), H2)

    wp = 0.1 * jax.random.normal(next(k), (1, D + H2), jnp.float32)
    bp = 0.1 * jax.random.normal(next(k), (1, 1), jnp.float32)
    wpc, wpd = wp[:, :D], wp[:, D:]

    return emb_tables, (wc, bc, s0, t0, w1, b1, s1, t1, w2, b2, s2, t2,
                        wpc, wpd, bp)


def embed_and_concat(emb_tables, sparse_data, dense_data):
    """Batch-major [B, D] f32 (reference path; PyTorch get_emb + cat)."""
    emb = jnp.concatenate(
        [tbl[sparse_data[:, i]] for i, tbl in enumerate(emb_tables)], axis=1)
    return jnp.concatenate([emb, dense_data], axis=1)


def embed_and_concat_t(emb_tables, sparse_data, dense_data,
                       dtype=jnp.bfloat16):
    """Feature-major [D, B] activations built directly in the streaming dtype
    (gather into a transposed buffer) -> no wrapper transpose/pad of x0."""
    cols = [jnp.take(tbl.T.astype(dtype), sparse_data[:, i], axis=1)
            for i, tbl in enumerate(emb_tables)]
    cols.append(dense_data.T.astype(dtype))
    return jnp.concatenate(cols, axis=0)


def dcn_reference(x0, params):
    """Literal translation of the PyTorch forward (cross loop kept as written,
    i.e. `emb` overwritten each iteration; eval-mode BN/dropout)."""
    (wc, bc, s0, t0, w1, b1, s1, t1, w2, b2, s2, t2, wpc, wpd, bp) = params
    cross = x0
    for i in range(wc.shape[0]):
        proj = jnp.sum(x0 * wc[i:i + 1, :], axis=-1, keepdims=True)
        cross = x0 * proj + bc[i:i + 1, :] + x0
    h = x0 * s0 + t0
    h = jnp.maximum(h @ w1 + b1, 0.0) * s1 + t1
    h = jnp.maximum(h @ w2 + b2, 0.0) * s2 + t2
    logit = (jnp.sum(cross * wpc, axis=-1, keepdims=True)
             + jnp.sum(h * wpd, axis=-1, keepdims=True) + bp)
    return jax.nn.sigmoid(logit)


if __name__ == "__main__":
    emb_dim = 8
    cross_layer_num = 2
    sparse_dim_dict = {"user_id": 11, "item_id": 23, "category": 7}
    dense_dim = 5
    hidden_dims = [16, 8]
    # 2000 is not a multiple of the 512-row demo tile -> exercises the
    # OOB-tail block path; grid has 4 steps so both v7x TCs get work.
    batch = 2000

    key = jax.random.PRNGKey(0)
    k_param, k_sparse, k_dense = jax.random.split(key, 3)

    emb_tables, params = make_params(
        k_param, emb_dim, cross_layer_num, sparse_dim_dict, dense_dim,
        hidden_dims)

    sparse_keys = jax.random.split(k_sparse, len(sparse_dim_dict))
    sparse_cols = [
        jax.random.randint(sparse_keys[i], (batch,), 0, vocab, jnp.int32)
        for i, vocab in enumerate(sparse_dim_dict.values())
    ]
    sparse_data = jnp.stack(sparse_cols, axis=1)
    dense_data = jax.random.normal(k_dense, (batch, dense_dim), jnp.float32)

    # pure-JAX reference (literal module semantics)
    x0 = embed_and_concat(emb_tables, sparse_data, dense_data)      # [B, D]
    ref = dcn_reference(x0, params)

    # default path: bf16 streaming (portable: v5e / v6e / v7x)
    x0t_bf16 = embed_and_concat_t(emb_tables, sparse_data, dense_data,
                                  jnp.bfloat16)
    out = jax.block_until_ready(dcn_forward_pallas(x0t_bf16, params))
    assert out.shape == (batch, 1), out.shape
    assert jnp.allclose(out, ref, rtol=2e-2, atol=2e-2), \
        float(jnp.max(jnp.abs(out - ref)))

    # f32 streaming sanity check (tight tolerance)
    x0t_f32 = embed_and_concat_t(emb_tables, sparse_data, dense_data,
                                 jnp.float32)
    out_f32 = jax.block_until_ready(dcn_forward_pallas(x0t_f32, params))
    assert jnp.allclose(out_f32, ref, rtol=2e-3, atol=2e-3), \
        float(jnp.max(jnp.abs(out_f32 - ref)))

    print("KERNEL_OK")
</pallas_src>

<mosaic_0001>
module attributes {stable_mosaic.version = 11 : i64} {
  func.func @dcn_kernel(%arg0: i32, %arg1: memref<29x512xbf16, #tpu.memory_space<vmem>>, %arg2: memref<32x29xbf16, #tpu.memory_space<vmem>>, %arg3: memref<16x1xf32, #tpu.memory_space<vmem>>, %arg4: memref<8x16xbf16, #tpu.memory_space<vmem>>, %arg5: memref<8x1xf32, #tpu.memory_space<vmem>>, %arg6: memref<8x1xf32, #tpu.memory_space<vmem>>, %arg7: memref<1xf32, #tpu.memory_space<smem>>, %arg8: memref<1x512xf32, #tpu.memory_space<vmem>>) attributes {dimension_semantics = [#tpu.dimension_semantics<parallel>], iteration_bounds = array<i64: 4>, scalar_prefetch = 0 : i64, scratch_operands = 0 : i64, tpu.core_type = #tpu.core_type<tc>, window_params = [{transform_indices = @transform_0, window_bounds = array<i64: 29, 512>}, {pipeline_mode = #tpu.pipeline_mode<synchronous>, transform_indices = @transform_1, window_bounds = array<i64: 32, 29>}, {pipeline_mode = #tpu.pipeline_mode<synchronous>, transform_indices = @transform_2, window_bounds = array<i64: 16, 1>}, {pipeline_mode = #tpu.pipeline_mode<synchronous>, transform_indices = @transform_3, window_bounds = array<i64: 8, 16>}, {pipeline_mode = #tpu.pipeline_mode<synchronous>, transform_indices = @transform_4, window_bounds = array<i64: 8, 1>}, {pipeline_mode = #tpu.pipeline_mode<synchronous>, transform_indices = @transform_5, window_bounds = array<i64: 8, 1>}, {transform_indices = @transform_6, window_bounds = array<i64: 1>}, {transform_indices = @transform_7, window_bounds = array<i64: 1, 512>}]} {
    %c0 = arith.constant 0 : index
    %c0_0 = arith.constant 0 : index
    %0 = vector.load %arg1[%c0, %c0_0] : memref<29x512xbf16, #tpu.memory_space<vmem>>, vector<29x512xbf16>
    %c0_1 = arith.constant 0 : index
    %c0_2 = arith.constant 0 : index
    %1 = vector.load %arg2[%c0_1, %c0_2] : memref<32x29xbf16, #tpu.memory_space<vmem>>, vector<32x29xbf16>
    %cst = arith.constant dense<0.000000e+00> : vector<32x512xf32>
    %2 = tpu.matmul %1, %0, %cst {dimension_numbers = #tpu.dot_dimension_numbers<[1], [0], [0], [1], [0, 0, 1, 1], [], []>} : vector<32x29xbf16>, vector<29x512xbf16>, vector<32x512xf32> -> vector<32x512xf32>
    %3 = vector.extract_strided_slice %2 {offsets = [0, 0], sizes = [1, 512], strides = [1, 1]} : vector<32x512xf32> to vector<1x512xf32>
    %4 = vector.extract_strided_slice %2 {offsets = [1, 0], sizes = [1, 512], strides = [1, 1]} : vector<32x512xf32> to vector<1x512xf32>
    %5 = vector.extract_strided_slice %2 {offsets = [8, 0], sizes = [16, 512], strides = [1, 1]} : vector<32x512xf32> to vector<16x512xf32>
    %c0_3 = arith.constant 0 : index
    %c0_4 = arith.constant 0 : index
    %6 = vector.load %arg3[%c0_3, %c0_4] : memref<16x1xf32, #tpu.memory_space<vmem>>, vector<16x1xf32>
    %7 = vector.broadcast %6 : vector<16x1xf32> to vector<16x512xf32>
    %8 = arith.addf %5, %7 : vector<16x512xf32>
    %cst_5 = arith.constant 0.000000e+00 : f32
    %9 = vector.broadcast %cst_5 : f32 to vector<16x512xf32>
    %10 = arith.maximumf %8, %9 : vector<16x512xf32>
    %c0_6 = arith.constant 0 : index
    %c0_7 = arith.constant 0 : index
    %11 = vector.load %arg4[%c0_6, %c0_7] : memref<8x16xbf16, #tpu.memory_space<vmem>>, vector<8x16xbf16>
    %12 = arith.truncf %10 : vector<16x512xf32> to vector<16x512xbf16>
    %cst_8 = arith.constant dense<0.000000e+00> : vector<8x512xf32>
    %13 = tpu.matmul %11, %12, %cst_8 {dimension_numbers = #tpu.dot_dimension_numbers<[1], [0], [0], [1], [0, 0, 1, 1], [], []>} : vector<8x16xbf16>, vector<16x512xbf16>, vector<8x512xf32> -> vector<8x512xf32>
    %c0_9 = arith.constant 0 : index
    %c0_10 = arith.constant 0 : index
    %14 = vector.load %arg5[%c0_9, %c0_10] : memref<8x1xf32, #tpu.memory_space<vmem>>, vector<8x1xf32>
    %15 = vector.broadcast %14 : vector<8x1xf32> to vector<8x512xf32>
    %16 = arith.addf %13, %15 : vector<8x512xf32>
    %cst_11 = arith.constant 0.000000e+00 : f32
    %17 = vector.broadcast %cst_11 : f32 to vector<8x512xf32>
    %18 = arith.maximumf %16, %17 : vector<8x512xf32>
    %c0_12 = arith.constant 0 : index
    %c0_13 = arith.constant 0 : index
    %19 = vector.load %arg6[%c0_12, %c0_13] : memref<8x1xf32, #tpu.memory_space<vmem>>, vector<8x1xf32>
    %20 = vector.broadcast %19 : vector<8x1xf32> to vector<8x512xf32>
    %21 = arith.mulf %18, %20 : vector<8x512xf32>
    %cst_14 = arith.constant dense<0.000000e+00> : vector<512xf32>
    %22 = vector.multi_reduction <add>, %21, %cst_14 [0] : vector<8x512xf32> to vector<512xf32>
    %23 = vector.shape_cast %22 : vector<512xf32> to vector<1x512xf32>
    %cst_15 = arith.constant 1.000000e+00 : f32
    %24 = vector.broadcast %cst_15 : f32 to vector<1x512xf32>
    %25 = arith.addf %3, %24 : vector<1x512xf32>
    %26 = arith.mulf %25, %4 : vector<1x512xf32>
    %27 = arith.addf %26, %23 : vector<1x512xf32>
    %c0_16 = arith.constant 0 : index
    %28 = memref.load %arg7[%c0_16] : memref<1xf32, #tpu.memory_space<smem>>
    %29 = vector.broadcast %28 : f32 to vector<1x512xf32>
    %30 = arith.addf %27, %29 : vector<1x512xf32>
    %31 = arith.negf %30 : vector<1x512xf32>
    %32 = math.exp %31 : vector<1x512xf32>
    %cst_17 = arith.constant 1.000000e+00 : f32
    %33 = vector.broadcast %cst_17 : f32 to vector<1x512xf32>
    %34 = arith.addf %33, %32 : vector<1x512xf32>
    %35 = arith.divf %33, %34 : vector<1x512xf32>
    %c0_18 = arith.constant 0 : index
    %c0_19 = arith.constant 0 : index
    %36 = vector.load %arg8[%c0_18, %c0_19] : memref<1x512xf32, #tpu.memory_space<vmem>>, vector<1x512xf32>
    tpu.vector_store %arg8[%c0_18, %c0_19], %35 {strides = array<i32>} : memref<1x512xf32, #tpu.memory_space<vmem>>, vector<1x512xf32>,
    return
  }
  func.func @transform_0(%arg0: i32) -> (i32, i32) {
    %c0_i32 = arith.constant 0 : i32
    %c0_i32_0 = arith.constant 0 : i32
    return %c0_i32, %arg0 : i32, i32
  }
  func.func @transform_1(%arg0: i32) -> (i32, i32) {
    %c0_i32 = arith.constant 0 : i32
    %c0_i32_0 = arith.constant 0 : i32
    %c0_i32_1 = arith.constant 0 : i32
    return %c0_i32, %c0_i32_0 : i32, i32
  }
  func.func @transform_2(%arg0: i32) -> (i32, i32) {
    %c0_i32 = arith.constant 0 : i32
    %c0_i32_0 = arith.constant 0 : i32
    %c0_i32_1 = arith.constant 0 : i32
    return %c0_i32, %c0_i32_0 : i32, i32
  }
  func.func @transform_3(%arg0: i32) -> (i32, i32) {
    %c0_i32 = arith.constant 0 : i32
    %c0_i32_0 = arith.constant 0 : i32
    %c0_i32_1 = arith.constant 0 : i32
    return %c0_i32, %c0_i32_0 : i32, i32
  }
  func.func @transform_4(%arg0: i32) -> (i32, i32) {
    %c0_i32 = arith.constant 0 : i32
    %c0_i32_0 = arith.constant 0 : i32
    %c0_i32_1 = arith.constant 0 : i32
    return %c0_i32, %c0_i32_0 : i32, i32
  }
  func.func @transform_5(%arg0: i32) -> (i32, i32) {
    %c0_i32 = arith.constant 0 : i32
    %c0_i32_0 = arith.constant 0 : i32
    %c0_i32_1 = arith.constant 0 : i32
    return %c0_i32, %c0_i32_0 : i32, i32
  }
  func.func @transform_6(%arg0: i32) -> i32 {
    %c0_i32 = arith.constant 0 : i32
    %c0_i32_0 = arith.constant 0 : i32
    return %c0_i32 : i32
  }
  func.func @transform_7(%arg0: i32) -> (i32, i32) {
    %c0_i32 = arith.constant 0 : i32
    %c0_i32_0 = arith.constant 0 : i32
    return %c0_i32, %arg0 : i32, i32
  }
}

</mosaic_0001>

<llo_original>
// kernel: tpu_custom_call.1
$region0: #{tpu_custom_call.1}
  #allocation0 [shape = 'u32[]', space=smem, size = 0x4, offset = 0x4, fixed_abs, tag = 'smem constant byte address 0x4 - core index']
  #allocation1 [shape = 'u32[144,128]{1,0:T(1,128)}', space=vmem, size = 0x12000, scoped, tag = 'internal scratch']
  #allocation2 [shape = 'f32[1]{0:T(128)S(6)}', space=smem, size = 0x200, scoped, tag = 'scoped memory for tpu_custom_call.1']
  %s0 = inlined_call_operand.hbm [shape: bf16[29,2000], index: 0, kind: input, shape index: {}]
  %s1 = inlined_call_operand.vmem [shape: bf16[32,29], index: 1, kind: input, shape index: {}]
  %s2 = inlined_call_operand.vmem [shape: f32[16,1], index: 2, kind: input, shape index: {}]
  %s3 = inlined_call_operand.vmem [shape: bf16[8,16], index: 3, kind: input, shape index: {}]
  %s4 = inlined_call_operand.vmem [shape: f32[8,1], index: 4, kind: input, shape index: {}]
  %s5 = inlined_call_operand.vmem [shape: f32[8,1], index: 5, kind: input, shape index: {}]
  %s6 = inlined_call_operand.<no memory space> [shape: f32[1], index: 6, kind: input, shape index: {}]
  %s7 = inlined_call_operand.hbm [shape: f32[1,2000], index: 7, kind: output, shape index: {}]
  %s8 = sld [smem:[#allocation0]]
  $region65: #{tpu_custom_call.1} parent=0
    _
  %s10 = ssub.s32 1, %s8
  %s11 = scalar_select 0, %s10, %s8
  %12 = sst [smem:[#allocation2]] %s6
  $region1: #{tpu_custom_call.1} parent=0
    #allocation3 [shape = 'u8[65536]{0}', space=vmem, size = 0x10000, scoped, tag = 'input window, operand 0']
    #allocation4 [shape = 's32[2]{0}', space=sflag, size = 0x8, scoped, tag = 'scoped memory for tpu_custom_call.1']
    #allocation5 [shape = 's32[2]{0}', space=sflag, size = 0x8, scoped, tag = 'scoped memory for tpu_custom_call.1']
    #allocation6 [shape = 'u8[4096]{0}', space=vmem, size = 0x1000, scoped, tag = 'output window, operand 0']
    %13 = vsyncpa [#allocation4], 0
    %s14 = scalar_lea.sflag [#allocation4], 1
    %15 = vsyncpa %s14, 0
    %16 = vsyncpa [#allocation5], 0
    %s17 = scalar_lea.sflag [#allocation5], 1
    %18 = vsyncpa %s17, 0
    loop: start=0, step=1, limit=6
    $region2: #{tpu_custom_call.1} parent=1 // loop_pre_header
      _
    $region3: #{tpu_custom_call.1} parent=1 // loop_header
      %s20 = sphi 0, %s24
      %p21 = scmp.ge.s32.totalorder %s20, 6
      %s30 = sphi 0, %s32
      %s33 = sphi 0, %s30
      %s34 = sphi 0, %s33
      %s50 = sphi 0, %s34
      %s54 = sphi 0, %s54
      %s56 = sphi 0, %s54
      %s57 = sphi 0, %s56
      %s71 = sphi 0, %s57
      %s75 = sphi 0, %s75
      %s77 = sphi 0, %s75
      %s78 = sphi 0, %s77
      %s92 = sphi 0, %s78
      %s96 = sphi 0, %s96
      %s98 = sphi 0, %s96
      %s99 = sphi 0, %s98
      %s113 = sphi 0, %s99
      %s117 = sphi 0, %s117
      %s119 = sphi 0, %s117
      %s120 = sphi 0, %s119
      %s134 = sphi 0, %s120
      %s138 = sphi 0, %s138
      %s140 = sphi 0, %s138
      %s141 = sphi 0, %s140
      %s155 = sphi 0, %s141
      %s159 = sphi 0, %s159
      %s161 = sphi 0, %s159
      %s162 = sphi 0, %s161
      %s176 = sphi 0, %s162
      %s182 = sphi 0, %s184
      %s185 = sphi 0, %s182
      %s186 = sphi 0, %s185
      %s202 = sphi 0, %s186
    $region4: #{tpu_custom_call.1} parent=1 // loop_header_branch
      %23 = sbr.rel (%p21) target = $region8
    $region5: #{tpu_custom_call.1} parent=1 // loop_body
      %s25 = ssub.s32 %s20, 1
      %s26 = ssub.s32 %s20, 2
      %s27 = sadd.s32 %s20, 1
      %s28 = ssub.s32 %s20, %s27
      %p29 = scmp.eq.s32.totalorder %s28, 0
      %s31 = sadd.s32 %s30, 1
      %s32 = scalar_select %p29, %s30, %s31
      %p35 = pneg %p29
      %p36 = scmp.eq.s32.totalorder %s20, 3
      %p37 = por %p35, %p36
      %p38 = scmp.ne.s32.totalorder %s30, %s33
      %p39 = scmp.eq.s32.totalorder %s20, 0
      %p40 = por %p38, %p39
      %p41 = scmp.ne.s32.totalorder %s30, %s33
      %p42 = scmp.eq.s32.totalorder %s25, 3
      %p43 = por %p41, %p42
      %p44 = scmp.ne.s32.totalorder %s33, %s34
      %p45 = scmp.eq.s32.totalorder %s25, 0
      %p46 = por %p44, %p45
      %p47 = scmp.ne.s32.totalorder %s33, %s34
      %p48 = scmp.eq.s32.totalorder %s26, 3
      %p49 = por %p47, %p48
      %p51 = scmp.ne.s32.totalorder %s34, %s50
      %p52 = scmp.eq.s32.totalorder %s26, 0
      %p53 = por %p51, %p52
      %s55 = sadd.s32 %s54, 1
      %p58 = scmp.eq.s32.totalorder %s20, 3
      %p59 = scmp.ne.s32.totalorder %s54, %s56
      %p60 = scmp.eq.s32.totalorder %s20, 0
      %p61 = por %p59, %p60
      %p62 = scmp.ne.s32.totalorder %s54, %s56
      %p63 = scmp.eq.s32.totalorder %s25, 3
      %p64 = por %p62, %p63
      %p65 = scmp.ne.s32.totalorder %s56, %s57
      %p66 = scmp.eq.s32.totalorder %s25, 0
      %p67 = por %p65, %p66
      %p68 = scmp.ne.s32.totalorder %s56, %s57
      %p69 = scmp.eq.s32.totalorder %s26, 3
      %p70 = por %p68, %p69
      %p72 = scmp.ne.s32.totalorder %s57, %s71
      %p73 = scmp.eq.s32.totalorder %s26, 0
      %p74 = por %p72, %p73
      %s76 = sadd.s32 %s75, 1
      %p79 = scmp.eq.s32.totalorder %s20, 3
      %p80 = scmp.ne.s32.totalorder %s75, %s77
      %p81 = scmp.eq.s32.totalorder %s20, 0
      %p82 = por %p80, %p81
      %p83 = scmp.ne.s32.totalorder %s75, %s77
      %p84 = scmp.eq.s32.totalorder %s25, 3
      %p85 = por %p83, %p84
      %p86 = scmp.ne.s32.totalorder %s77, %s78
      %p87 = scmp.eq.s32.totalorder %s25, 0
      %p88 = por %p86, %p87
      %p89 = scmp.ne.s32.totalorder %s77, %s78
      %p90 = scmp.eq.s32.totalorder %s26, 3
      %p91 = por %p89, %p90
      %p93 = scmp.ne.s32.totalorder %s78, %s92
      %p94 = scmp.eq.s32.totalorder %s26, 0
      %p95 = por %p93, %p94
      %s97 = sadd.s32 %s96, 1
      %p100 = scmp.eq.s32.totalorder %s20, 3
      %p101 = scmp.ne.s32.totalorder %s96, %s98
      %p102 = scmp.eq.s32.totalorder %s20, 0
      %p103 = por %p101, %p102
      %p104 = scmp.ne.s32.totalorder %s96, %s98
      %p105 = scmp.eq.s32.totalorder %s25, 3
      %p106 = por %p104, %p105
      %p107 = scmp.ne.s32.totalorder %s98, %s99
      %p108 = scmp.eq.s32.totalorder %s25, 0
      %p109 = por %p107, %p108
      %p110 = scmp.ne.s32.totalorder %s98, %s99
      %p111 = scmp.eq.s32.totalorder %s26, 3
      %p112 = por %p110, %p111
      %p114 = scmp.ne.s32.totalorder %s99, %s113
      %p115 = scmp.eq.s32.totalorder %s26, 0
      %p116 = por %p114, %p115
      %s118 = sadd.s32 %s117, 1
      %p121 = scmp.eq.s32.totalorder %s20, 3
      %p122 = scmp.ne.s32.totalorder %s117, %s119
      %p123 = scmp.eq.s32.totalorder %s20, 0
      %p124 = por %p122, %p123
      %p125 = scmp.ne.s32.totalorder %s117, %s119
      %p126 = scmp.eq.s32.totalorder %s25, 3
      %p127 = por %p125, %p126
      %p128 = scmp.ne.s32.totalorder %s119, %s120
      %p129 = scmp.eq.s32.totalorder %s25, 0
      %p130 = por %p128, %p129
      %p131 = scmp.ne.s32.totalorder %s119, %s120
      %p132 = scmp.eq.s32.totalorder %s26, 3
      %p133 = por %p131, %p132
      %p135 = scmp.ne.s32.totalorder %s120, %s134
      %p136 = scmp.eq.s32.totalorder %s26, 0
      %p137 = por %p135, %p136
      %s139 = sadd.s32 %s138, 1
      %p142 = scmp.eq.s32.totalorder %s20, 3
      %p143 = scmp.ne.s32.totalorder %s138, %s140
      %p144 = scmp.eq.s32.totalorder %s20, 0
      %p145 = por %p143, %p144
      %p146 = scmp.ne.s32.totalorder %s138, %s140
      %p147 = scmp.eq.s32.totalorder %s25, 3
      %p148 = por %p146, %p147
      %p149 = scmp.ne.s32.totalorder %s140, %s141
      %p150 = scmp.eq.s32.totalorder %s25, 0
      %p151 = por %p149, %p150
      %p152 = scmp.ne.s32.totalorder %s140, %s141
      %p153 = scmp.eq.s32.totalorder %s26, 3
      %p154 = por %p152, %p153
      %p156 = scmp.ne.s32.totalorder %s141, %s155
      %p157 = scmp.eq.s32.totalorder %s26, 0
      %p158 = por %p156, %p157
      %s160 = sadd.s32 %s159, 1
      %p163 = scmp.eq.s32.totalorder %s20, 3
      %p164 = scmp.ne.s32.totalorder %s159, %s161
      %p165 = scmp.eq.s32.totalorder %s20, 0
      %p166 = por %p164, %p165
      %p167 = scmp.ne.s32.totalorder %s159, %s161
      %p168 = scmp.eq.s32.totalorder %s25, 3
      %p169 = por %p167, %p168
      %p170 = scmp.ne.s32.totalorder %s161, %s162
      %p171 = scmp.eq.s32.totalorder %s25, 0
      %p172 = por %p170, %p171
      %p173 = scmp.ne.s32.totalorder %s161, %s162
      %p174 = scmp.eq.s32.totalorder %s26, 3
      %p175 = por %p173, %p174
      %p177 = scmp.ne.s32.totalorder %s162, %s176
      %p178 = scmp.eq.s32.totalorder %s26, 0
      %p179 = por %p177, %p178
      %s180 = ssub.s32 %s20, %s27
      %p181 = scmp.eq.s32.totalorder %s180, 0
      %s183 = sadd.s32 %s182, 1
      %s184 = scalar_select %p181, %s182, %s183
      %p187 = pneg %p181
      %p188 = scmp.eq.s32.totalorder %s20, 3
      %p189 = por %p187, %p188
      %p190 = scmp.ne.s32.totalorder %s182, %s185
      %p191 = scmp.eq.s32.totalorder %s20, 0
      %p192 = por %p190, %p191
      %p193 = scmp.ne.s32.totalorder %s182, %s185
      %p194 = scmp.eq.s32.totalorder %s25, 3
      %p195 = por %p193, %p194
      %p196 = scmp.ne.s32.totalorder %s185, %s186
      %p197 = scmp.eq.s32.totalorder %s25, 0
      %p198 = por %p196, %p197
      %p199 = scmp.ne.s32.totalorder %s185, %s186
      %p200 = scmp.eq.s32.totalorder %s26, 3
      %p201 = por %p199, %p200
      %p203 = scmp.ne.s32.totalorder %s186, %s202
      %p204 = scmp.eq.s32.totalorder %s26, 0
      %p205 = por %p203, %p204
      %p206 = scmp.le.s32.totalorder 1, %s20
      %p207 = scmp.lt.s32.totalorder %s20, 5
      %p208 = pnand %p206, %p207
      %p209 = pneg %p208
      // Predicated region
      $region9: #{tpu_custom_call.1} parent=5 // pred_check
        _
      $region10: #{tpu_custom_call.1} parent=5 // pred_check_branch
        %211 = sbr.rel (%p208) target = $region12
      $region11: #{tpu_custom_call.1} parent=5 // pred_region
        %s212 = ssub.s32 %s20, 1
        // Predicated region
        $region13: #{tpu_custom_call.1} parent=11 // pred_check
          %p213 = pneg %p67
        $region14: #{tpu_custom_call.1} parent=11 // pred_check_branch
          %215 = sbr.rel (%p213) target = $region16
        $region15: #{tpu_custom_call.1} parent=11 // pred_region
          _
        $region16: #{tpu_custom_call.1} parent=11 // pred_fallthru
          _
        // Predicated region
        $region17: #{tpu_custom_call.1} parent=11 // pred_check
          %p216 = pneg %p88
        $region18: #{tpu_custom_call.1} parent=11 // pred_check_branch
          %218 = sbr.rel (%p216) target = $region20
        $region19: #{tpu_custom_call.1} parent=11 // pred_region
          _
        $region20: #{tpu_custom_call.1} parent=11 // pred_fallthru
          _
        // Predicated region
        $region21: #{tpu_custom_call.1} parent=11 // pred_check
          %p219 = pneg %p109
        $region22: #{tpu_custom_call.1} parent=11 // pred_check_branch
          %221 = sbr.rel (%p219) target = $region24
        $region23: #{tpu_custom_call.1} parent=11 // pred_region
          _
        $region24: #{tpu_custom_call.1} parent=11 // pred_fallthru
          _
        // Predicated region
        $region25: #{tpu_custom_call.1} parent=11 // pred_check
          %p222 = pneg %p130
        $region26: #{tpu_custom_call.1} parent=11 // pred_check_branch
          %224 = sbr.rel (%p222) target = $region28
        $region27: #{tpu_custom_call.1} parent=11 // pred_region
          _
        $region28: #{tpu_custom_call.1} parent=11 // pred_fallthru
          _
        // Predicated region
        $region29: #{tpu_custom_call.1} parent=11 // pred_check
          %p225 = pneg %p151
        $region30: #{tpu_custom_call.1} parent=11 // pred_check_branch
          %227 = sbr.rel (%p225) target = $region32
        $region31: #{tpu_custom_call.1} parent=11 // pred_region
          _
        $region32: #{tpu_custom_call.1} parent=11 // pred_fallthru
          _
        // Predicated region
        $region33: #{tpu_custom_call.1} parent=11 // pred_check
          %p228 = pneg %p172
        $region34: #{tpu_custom_call.1} parent=11 // pred_check_branch
          %230 = sbr.rel (%p228) target = $region36
        $region35: #{tpu_custom_call.1} parent=11 // pred_region
          _
        $region36: #{tpu_custom_call.1} parent=11 // pred_fallthru
          _
      $region12: #{tpu_custom_call.1} parent=5 // pred_fallthru
        _
      %p231 = scmp.lt.s32.totalorder %s20, 4
      // Predicated region
      $region37: #{tpu_custom_call.1} parent=5 // pred_check
        %p232 = pneg %p231
      $region38: #{tpu_custom_call.1} parent=5 // pred_check_branch
        %234 = sbr.rel (%p232) target = $region40
      $region39: #{tpu_custom_call.1} parent=5 // pred_region
        // Predicated region
        $region41: #{tpu_custom_call.1} parent=39 // pred_check
          %p235 = pneg %p40
        $region42: #{tpu_custom_call.1} parent=39 // pred_check_branch
          %237 = sbr.rel (%p235) target = $region44
        $region43: #{tpu_custom_call.1} parent=39 // pred_region
          %s238 = sand.u32 %s30, 1
          %s239 = scalar_lea.sflag [#allocation4], %s238
          %s240 = sand.u32 %s30, 1
          %s241 = smul.addr %s240, 64
          %s242 = scalar_lea.vmem [#allocation3], %s241
          %s243 = smul.u32 4, %s20
          %s245 = ssub.s32 1024, 1024
          %246 = vsyncadd %s239, %s245
          %s247 = smul.addr %s243, 64
          %s248 = scalar_lea.hbm %s0, %s247
          %s249 = sshll.u32 %s242, 4
          %s250 = int_to_ptr.vmem [resolvable:$true] %s249
          %255 = dma.hbm_to_vmem [thread:$0]  %s248, 1024, %s250, %s239, 1024, 256, 16
        $region44: #{tpu_custom_call.1} parent=39 // pred_fallthru
          _
      $region40: #{tpu_custom_call.1} parent=5 // pred_fallthru
        _
      %p256 = scmp.le.s32.totalorder 1, %s20
      %p257 = scmp.lt.s32.totalorder %s20, 5
      %p258 = pnand %p256, %p257
      %p259 = pneg %p258
      // Predicated region
      $region45: #{tpu_custom_call.1} parent=5 // pred_check
        _
      $region46: #{tpu_custom_call.1} parent=5 // pred_check_branch
        %261 = sbr.rel (%p258) target = $region48
      $region47: #{tpu_custom_call.1} parent=5 // pred_region
        %s262 = ssub.s32 %s20, 1
        %s263 = sand.u32 %s33, 1
        %s264 = scalar_lea.sflag [#allocation4], %s263
        %s265 = sand.u32 %s33, 1
        %s266 = smul.addr %s265, 64
        %s267 = scalar_lea.vmem [#allocation3], %s266
        // Predicated region
        $region49: #{tpu_custom_call.1} parent=47 // pred_check
          %p268 = pneg %p46
        $region50: #{tpu_custom_call.1} parent=47 // pred_check_branch
          %270 = sbr.rel (%p268) target = $region52
        $region51: #{tpu_custom_call.1} parent=47 // pred_region
          %271 = dma.done %s264, 1024
        $region52: #{tpu_custom_call.1} parent=47 // pred_fallthru
          _
        %s272 = sand.u32 %s33, 1
        %s273 = scalar_lea.sflag [#allocation4], %s272
        %s274 = sand.u32 %s33, 1
        %s275 = smul.addr %s274, 64
        %s276 = scalar_lea.vmem [#allocation3], %s275
        %p277 = pneg %p46
        %p278 = pneg %p43
        %p279 = pneg %p67
        %p280 = pneg %p64
        %p281 = pneg %p88
        %p282 = pneg %p85
        %p283 = pneg %p109
        %p284 = pneg %p106
        %p285 = pneg %p130
        %p286 = pneg %p127
        %p287 = pneg %p151
        %p288 = pneg %p148
        %p289 = pneg %p172
        %p290 = pneg %p169
        %p291 = pneg %p198
        %p292 = pneg %p195
        %s293 = sand.u32 %s185, 1
        %s294 = scalar_lea.sflag [#allocation5], %s293
        %s295 = sand.u32 %s185, 1
        %s296 = smul.addr %s295, 4
        %s297 = scalar_lea.vmem [#allocation6], %s296
        %s298 = smul.u32 4, %s25
        %s299 = smul.u32 4, %s25
        %v301 = vld [vmem:[%s267] sm:$0xff]
        %v302 = vld [vmem:[%s267 + $0x8] sm:$0xff]
        %v303 = vld [vmem:[%s267 + $0x10] sm:$0xff]
        %v304 = vld [vmem:[%s267 + $0x18] sm:$0xff]
        %v305 = vld [vmem:[%s267 + $0x20] sm:$0xff]
        %v306 = vld [vmem:[%s267 + $0x28] sm:$0xff]
        %v307 = vld [vmem:[%s267 + $0x30] sm:$0x77]
        %v308 = vld [vmem:[%s267 + $0x38] sm:$0x77]
        %v309 = vld [vmem:[%s1] sm:$0xf]
        %v310 = vld [vmem:[%s1 + $0x4] sm:$0xf]
        %v311 = vld [vmem:[%s1 + $0x8] sm:$0xf]
        %v312 = vld [vmem:[%s1 + $0xc] sm:$0xf]
        %v317 = vunpack.c.l.b16 %v309
        %v318 = vunpack.c.l.b16 %v310
        %v319 = vunpack.c.l.b16 %v311
        %v320 = vunpack.c.l.b16 %v312
        %v321 = vpack.c.b16 %v318, %v317
        %v322 = vpack.c.b16 %v320, %v319
        %v331 = vunpack.c.l.b16 %v301
        %v332 = vunpack.c.h.b16 %v301
        %v333 = vunpack.c.l.b16 %v302
        %v334 = vunpack.c.h.b16 %v302
        %v335 = vunpack.c.l.b16 %v303
        %v336 = vunpack.c.h.b16 %v303
        %v337 = vunpack.c.l.b16 %v304
        %v338 = vunpack.c.h.b16 %v304
        %v339 = vunpack.c.l.b16 %v305
        %v340 = vunpack.c.h.b16 %v305
        %v341 = vunpack.c.l.b16 %v306
        %v342 = vunpack.c.h.b16 %v306
        %v343 = vunpack.c.l.b16 %v307
        %v344 = vunpack.c.h.b16 %v307
        %v345 = vunpack.c.l.b16 %v308
        %v346 = vunpack.c.h.b16 %v308
        %v347 = vpack.c.b16 %v335, %v331
        %v348 = vpack.c.b16 %v336, %v332
        %v349 = vpack.c.b16 %v337, %v333
        %v350 = vpack.c.b16 %v338, %v334
        %v351 = vpack.c.b16 %v343, %v339
        %v352 = vpack.c.b16 %v344, %v340
        %v353 = vpack.c.b16 %v345, %v341
        %v354 = vpack.c.b16 %v346, %v342
        %vm359 = vcmask 236544
        %v361 = vsel %vm359, %v321, 0
        %v364 = vsel %vm359, %v322, 0
        %vm366 = vcmask 1045504
        %vm367 = vcmask 1046528
        %v368 = vsel %vm366, 4294967295, 65535
        %v369 = vsel %vm367, %v368, 0
        %v371 = vand.u32 %v351, %v369
        %v374 = vand.u32 %v352, %v369
        %v377 = vand.u32 %v353, %v369
        %v380 = vand.u32 %v354, %v369
        %382 = vmatprep.subr.bf16.mxu0 0
        %383 = vmatpush1.bf16.msra.mxu0 0
        %384 = vmatprep.subr.bf16.mxu0 0
        %385 = vmatpush1.bf16.msra.mxu0 0
        %386 = vmatprep.subr.bf16.mxu0 0
        %387 = vmatpush1.bf16.msra.mxu0 0
        %388 = vmatprep.subr.bf16.mxu0 0
        %389 = vmatpush1.bf16.msra.mxu0 0
        %390 = vmatprep.subr.bf16.mxu0 0
        %391 = vmatpush1.bf16.msra.mxu0 0
        %392 = vmatprep.subr.bf16.mxu0 0
        %393 = vmatpush1.bf16.msra.mxu0 0
        %394 = vmatprep.subr.bf16.mxu0 %v374
        %395 = vmatpush1.bf16.msra.mxu0 %v371
        %396 = vmatprep.subr.bf16.mxu0 %v348
        %397 = vmatpush1.bf16.msra.mxu0 %v347
        %398 = vmatprep.subr.bf16.mxu0 0
        %399 = vmatpush2.bf16.msra.mxu0 0
        %400 = vmatprep.subr.bf16.mxu0 0
        %401 = vmatpush2.bf16.msra.mxu0 0
        %402 = vmatprep.subr.bf16.mxu0 0
        %403 = vmatpush2.bf16.msra.mxu0 0
        %404 = vmatprep.subr.bf16.mxu0 0
        %405 = vmatpush2.bf16.msra.mxu0 0
        %406 = vmatprep.subr.bf16.mxu0 0
        %407 = vmatpush2.bf16.msra.mxu0 0
        %408 = vmatprep.subr.bf16.mxu0 0
        %409 = vmatpush2.bf16.msra.mxu0 0
        %410 = vmatprep.subr.bf16.mxu0 0
        %411 = vmatpush2.bf16.msra.mxu0 0
        %412 = vmatprep.subr.bf16.mxu0 0
        %413 = vmatpush2.bf16.msra.mxu0 0
        %414 = vmatprep.mubr.bf16.mxu0 0
        %415 = vmatmul.mubr.bf16.gmra.mxu0 %v361
        %v416 = vpop.f32.mrf.mxu0
        %v417 = vadd.f32 0.0, %v416
        %v418 = vpop.f32.mrf.mxu0
        %v419 = vadd.f32 0.0, %v418
        %v420 = vpop.f32.mrf.mxu0
        %v421 = vadd.f32 0.0, %v420
        %v422 = vpop.f32.mrf.mxu0
        %v423 = vadd.f32 0.0, %v422
        %424 = vmatprep.mubr.bf16.mxu0 0
        %425 = vmatmul.mubr.bf16.gmra.mxu0 %v364
        %v426 = vpop.f32.mrf.mxu0
        %v427 = vadd.f32 0.0, %v426
        %v428 = vpop.f32.mrf.mxu0
        %v429 = vadd.f32 0.0, %v428
        %v430 = vpop.f32.mrf.mxu0
        %v431 = vpop.f32.mrf.mxu0
        %432 = vdwg.mxu0
        %433 = vmatprep.subr.bf16.mxu0 0
        %434 = vmatpush1.bf16.msra.mxu0 0
        %435 = vmatprep.subr.bf16.mxu0 0
        %436 = vmatpush1.bf16.msra.mxu0 0
        %437 = vmatprep.subr.bf16.mxu0 0
        %438 = vmatpush1.bf16.msra.mxu0 0
        %439 = vmatprep.subr.bf16.mxu0 0
        %440 = vmatpush1.bf16.msra.mxu0 0
        %441 = vmatprep.subr.bf16.mxu0 0
        %442 = vmatpush1.bf16.msra.mxu0 0
        %443 = vmatprep.subr.bf16.mxu0 0
        %444 = vmatpush1.bf16.msra.mxu0 0
        %445 = vmatprep.subr.bf16.mxu0 %v380
        %446 = vmatpush1.bf16.msra.mxu0 %v377
        %447 = vmatprep.subr.bf16.mxu0 %v350
        %448 = vmatpush1.bf16.msra.mxu0 %v349
        %449 = vmatprep.subr.bf16.mxu0 0
        %450 = vmatpush2.bf16.msra.mxu0 0
        %451 = vmatprep.subr.bf16.mxu0 0
        %452 = vmatpush2.bf16.msra.mxu0 0
        %453 = vmatprep.subr.bf16.mxu0 0
        %454 = vmatpush2.bf16.msra.mxu0 0
        %455 = vmatprep.subr.bf16.mxu0 0
        %456 = vmatpush2.bf16.msra.mxu0 0
        %457 = vmatprep.subr.bf16.mxu0 0
        %458 = vmatpush2.bf16.msra.mxu0 0
        %459 = vmatprep.subr.bf16.mxu0 0
        %460 = vmatpush2.bf16.msra.mxu0 0
        %461 = vmatprep.subr.bf16.mxu0 0
        %462 = vmatpush2.bf16.msra.mxu0 0
        %463 = vmatprep.subr.bf16.mxu0 0
        %464 = vmatpush2.bf16.msra.mxu0 0
        %465 = vmatprep.mubr.bf16.mxu0 0
        %466 = vmatmul.mubr.bf16.gmra.mxu0 %v361
        %v467 = vpop.f32.mrf.mxu0
        %v468 = vadd.f32 0.0, %v467
        %v469 = vpop.f32.mrf.mxu0
        %v470 = vadd.f32 0.0, %v469
        %v471 = vpop.f32.mrf.mxu0
        %v472 = vadd.f32 0.0, %v471
        %v473 = vpop.f32.mrf.mxu0
        %v474 = vadd.f32 0.0, %v473
        %475 = vmatprep.mubr.bf16.mxu0 0
        %476 = vmatmul.mubr.bf16.gmra.mxu0 %v364
        %v477 = vpop.f32.mrf.mxu0
        %v478 = vadd.f32 0.0, %v477
        %v479 = vpop.f32.mrf.mxu0
        %v480 = vadd.f32 0.0, %v479
        %v481 = vpop.f32.mrf.mxu0
        %v482 = vpop.f32.mrf.mxu0
        %483 = vdwg.mxu0
        %v484 = vld [vmem:[%s2] sm:$0xff]
        %v485 = vld [vmem:[%s2 + $0x8] sm:$0xff]
        %487 = vset.pattern.permute.xlu0 0
        %488 = vperm.xlu0 %487, %v484
        %v489 = vpop.permute.xlu0 %488
        %492 = vset.pattern.permute.xlu0 0
        %493 = vperm.xlu0 %492, %v485
        %v494 = vpop.permute.xlu0 %493
        %v496 = vadd.f32 %v421, %v489
        %v497 = vadd.f32 %v423, %v489
        %v498 = vadd.f32 %v472, %v489
        %v499 = vadd.f32 %v474, %v489
        %v500 = vadd.f32 %v427, %v494
        %v501 = vadd.f32 %v429, %v494
        %v502 = vadd.f32 %v478, %v494
        %v503 = vadd.f32 %v480, %v494
        %v504 = vmax.f32 %v496, 0.0
        %v505 = vmax.f32 %v497, 0.0
        %v506 = vmax.f32 %v498, 0.0
        %v507 = vmax.f32 %v499, 0.0
        %v508 = vmax.f32 %v500, 0.0
        %v509 = vmax.f32 %v501, 0.0
        %v510 = vmax.f32 %v502, 0.0
        %v511 = vmax.f32 %v503, 0.0
        %v512 = vld [vmem:[%s3] sm:$0xf]
        %v513 = vpack.c.bf16 %v508, %v504
        %v514 = vpack.c.bf16 %v509, %v505
        %v515 = vpack.c.bf16 %v510, %v506
        %v516 = vpack.c.bf16 %v511, %v507
        %v517 = vld [vmem:[%s4] sm:$0xff]
        %519 = vset.pattern.permute.xlu0 0
        %520 = vperm.xlu0 %519, %v517
        %v521 = vpop.permute.xlu0 %520
        %vm523 = vcmask 130048
        %v525 = vsel %vm523, %v512, 0
        %527 = vmatprep.subr.bf16.mxu0 0
        %528 = vmatpush1.bf16.msra.mxu0 0
        %529 = vmatprep.subr.bf16.mxu0 0
        %530 = vmatpush1.bf16.msra.mxu0 0
        %531 = vmatprep.subr.bf16.mxu0 0
        %532 = vmatpush1.bf16.msra.mxu0 0
        %533 = vmatprep.subr.bf16.mxu0 0
        %534 = vmatpush1.bf16.msra.mxu0 0
        %535 = vmatprep.subr.bf16.mxu0 0
        %536 = vmatpush1.bf16.msra.mxu0 0
        %537 = vmatprep.subr.bf16.mxu0 0
        %538 = vmatpush1.bf16.msra.mxu0 0
        %539 = vmatprep.subr.bf16.mxu0 0
        %540 = vmatpush1.bf16.msra.mxu0 0
        %541 = vmatprep.subr.bf16.mxu0 %v514
        %542 = vmatpush1.bf16.msra.mxu0 %v513
        %543 = vmatprep.subr.bf16.mxu0 0
        %544 = vmatpush2.bf16.msra.mxu0 0
        %545 = vmatprep.subr.bf16.mxu0 0
        %546 = vmatpush2.bf16.msra.mxu0 0
        %547 = vmatprep.subr.bf16.mxu0 0
        %548 = vmatpush2.bf16.msra.mxu0 0
        %549 = vmatprep.subr.bf16.mxu0 0
        %550 = vmatpush2.bf16.msra.mxu0 0
        %551 = vmatprep.subr.bf16.mxu0 0
        %552 = vmatpush2.bf16.msra.mxu0 0
        %553 = vmatprep.subr.bf16.mxu0 0
        %554 = vmatpush2.bf16.msra.mxu0 0
        %555 = vmatprep.subr.bf16.mxu0 0
        %556 = vmatpush2.bf16.msra.mxu0 0
        %557 = vmatprep.subr.bf16.mxu0 0
        %558 = vmatpush2.bf16.msra.mxu0 0
        %559 = vmatprep.mubr.bf16.mxu0 0
        %560 = vmatmul.mubr.bf16.gmra.mxu0 %v525
        %v561 = vpop.f32.mrf.mxu0
        %v562 = vadd.f32 %v521, %v561
        %v563 = vpop.f32.mrf.mxu0
        %v564 = vadd.f32 %v521, %v563
        %v565 = vpop.f32.mrf.mxu0
        %v566 = vpop.f32.mrf.mxu0
        %567 = vdwg.mxu0
        %568 = vmatprep.subr.bf16.mxu0 0
        %569 = vmatpush1.bf16.msra.mxu0 0
        %570 = vmatprep.subr.bf16.mxu0 0
        %571 = vmatpush1.bf16.msra.mxu0 0
        %572 = vmatprep.subr.bf16.mxu0 0
        %573 = vmatpush1.bf16.msra.mxu0 0
        %574 = vmatprep.subr.bf16.mxu0 0
        %575 = vmatpush1.bf16.msra.mxu0 0
        %576 = vmatprep.subr.bf16.mxu0 0
        %577 = vmatpush1.bf16.msra.mxu0 0
        %578 = vmatprep.subr.bf16.mxu0 0
        %579 = vmatpush1.bf16.msra.mxu0 0
        %580 = vmatprep.subr.bf16.mxu0 0
        %581 = vmatpush1.bf16.msra.mxu0 0
        %582 = vmatprep.subr.bf16.mxu0 %v516
        %583 = vmatpush1.bf16.msra.mxu0 %v515
        %584 = vmatprep.subr.bf16.mxu0 0
        %585 = vmatpush2.bf16.msra.mxu0 0
        %586 = vmatprep.subr.bf16.mxu0 0
        %587 = vmatpush2.bf16.msra.mxu0 0
        %588 = vmatprep.subr.bf16.mxu0 0
        %589 = vmatpush2.bf16.msra.mxu0 0
        %590 = vmatprep.subr.bf16.mxu0 0
        %591 = vmatpush2.bf16.msra.mxu0 0
        %592 = vmatprep.subr.bf16.mxu0 0
        %593 = vmatpush2.bf16.msra.mxu0 0
        %594 = vmatprep.subr.bf16.mxu0 0
        %595 = vmatpush2.bf16.msra.mxu0 0
        %596 = vmatprep.subr.bf16.mxu0 0
        %597 = vmatpush2.bf16.msra.mxu0 0
        %598 = vmatprep.subr.bf16.mxu0 0
        %599 = vmatpush2.bf16.msra.mxu0 0
        %600 = vmatprep.mubr.bf16.mxu0 0
        %601 = vmatmul.mubr.bf16.gmra.mxu0 %v525
        %v602 = vpop.f32.mrf.mxu0
        %v603 = vadd.f32 %v521, %v602
        %v604 = vpop.f32.mrf.mxu0
        %v605 = vadd.f32 %v521, %v604
        %v606 = vpop.f32.mrf.mxu0
        %v607 = vpop.f32.mrf.mxu0
        %608 = vdwg.mxu0
        %v609 = vmax.f32 %v562, 0.0
        %v610 = vmax.f32 %v564, 0.0
        %v611 = vmax.f32 %v603, 0.0
        %v612 = vmax.f32 %v605, 0.0
        %v613 = vld [vmem:[%s5] sm:$0xff]
        %615 = vset.pattern.permute.xlu0 0
        %616 = vperm.xlu0 %615, %v613
        %v617 = vpop.permute.xlu0 %616
        %v619 = vmul.f32 %v609, %v617
        %v620 = vmul.f32 %v610, %v617
        %v621 = vmul.f32 %v611, %v617
        %v622 = vmul.f32 %v612, %v617
        %v623 = vrot.slane %v619, 4
        %v624 = vadd.f32 %v619, %v623
        %v625 = vrot.slane %v624, 2
        %v626 = vadd.f32 %v624, %v625
        %v627 = vrot.slane %v626, 1
        %v628 = vadd.f32 %v626, %v627
        %v629 = vrot.slane %v620, 4
        %v630 = vadd.f32 %v620, %v629
        %v631 = vrot.slane %v630, 2
        %v632 = vadd.f32 %v630, %v631
        %v633 = vrot.slane %v632, 1
        %v634 = vadd.f32 %v632, %v633
        %v635 = vrot.slane %v621, 4
        %v636 = vadd.f32 %v621, %v635
        %v637 = vrot.slane %v636, 2
        %v638 = vadd.f32 %v636, %v637
        %v639 = vrot.slane %v638, 1
        %v640 = vadd.f32 %v638, %v639
        %v641 = vrot.slane %v622, 4
        %v642 = vadd.f32 %v622, %v641
        %v643 = vrot.slane %v642, 2
        %v644 = vadd.f32 %v642, %v643
        %v645 = vrot.slane %v644, 1
        %v646 = vadd.f32 %v644, %v645
        %v647 = vadd.f32 %v417, 1.0
        %v648 = vadd.f32 %v419, 1.0
        %v649 = vadd.f32 %v468, 1.0
        %v650 = vadd.f32 %v470, 1.0
        %v655 = vrot.slane %v417, 1
        %v656 = vrot.slane %v419, 1
        %v657 = vrot.slane %v468, 1
        %v658 = vrot.slane %v470, 1
        %v663 = vmul.f32 %v647, %v655
        %v664 = vmul.f32 %v648, %v656
        %v665 = vmul.f32 %v649, %v657
        %v666 = vmul.f32 %v650, %v658
        %v667 = vadd.f32 %v663, %v628
        %v668 = vadd.f32 %v664, %v634
        %v669 = vadd.f32 %v665, %v640
        %v670 = vadd.f32 %v666, %v646
        %s671 = sld [smem:[#allocation2]]
        %v672 = vstv %s671
        %v673 = vadd.f32 %v667, %v672
        %v674 = vadd.f32 %v668, %v672
        %v675 = vadd.f32 %v669, %v672
        %v676 = vadd.f32 %v670, %v672
        %v677 = vxor.u32 %v673, 2147483648
        %v678 = vxor.u32 %v674, 2147483648
        %v679 = vxor.u32 %v675, 2147483648
        %v680 = vxor.u32 %v676, 2147483648
        %v681 = vmul.f32 %v677, 1.442695
        %v682 = vpow.pop %v681
        %v683 = vmul.f32 %v678, 1.442695
        %v684 = vpow.pop %v683
        %v685 = vmul.f32 %v679, 1.442695
        %v686 = vpow.pop %v685
        %v687 = vmul.f32 %v680, 1.442695
        %v688 = vpow.pop %v687
        %v689 = vadd.f32 %v682, 1.0
        %v690 = vadd.f32 %v684, 1.0
        %v691 = vadd.f32 %v686, 1.0
        %v692 = vadd.f32 %v688, 1.0
        %v693 = vrcp.pop %v689
        %v694 = vmul.f32 1.0, %v693
        %v695 = vrcp.pop %v690
        %v696 = vmul.f32 1.0, %v695
        %v697 = vrcp.pop %v691
        %v698 = vmul.f32 1.0, %v697
        %v699 = vrcp.pop %v692
        %v700 = vmul.f32 1.0, %v699
        %v705 = vcombine.low %v694, %v696
        %v706 = vcombine.low %v698, %v700
        %v708 = vunpack.c.l.s4 1966171168
        %v709 = vunpack.c.0.s8 %v708
        %v710 = vlaneseq
        %v711 = vshrl.u32 %v710, 7
        %v712 = vsub.s32 %v709, %v711
        %v713 = vrot.slane %v705, %v712
        %v715 = vunpack.c.l.s4 1966171168
        %v716 = vunpack.c.0.s8 %v715
        %v717 = vlaneseq
        %v718 = vshrl.u32 %v717, 7
        %v719 = vsub.s32 %v716, %v718
        %v720 = vrot.slane %v706, %v719
        %v721 = vcombine.low %v713, %v720
        %v723 = vunpack.c.l.s4 1966171168
        %v724 = vunpack.c.0.s8 %v723
        %v725 = vlaneseq
        %v726 = vshrl.u32 %v725, 7
        %v727 = vsub.s32 %v724, %v726
        %v728 = vrot.slane %v721, %v727
        %v730 = vlaneseq
        %vm731 = vcmp.ge.s32.totalorder %v730, 0
        %vm732 = vcmp.lt.s32.totalorder %v730, 512
        %vm733 = vmand %vm731, %vm732
        %734 = vst.msk [vmem:[%s297] sm:$0xf] %vm733, %v728
        %s735 = sand.u32 %s185, 1
        %s736 = scalar_lea.sflag [#allocation5], %s735
        %s737 = sand.u32 %s185, 1
        %s738 = smul.addr %s737, 4
        %s739 = scalar_lea.vmem [#allocation6], %s738
        // Predicated region
        $region53: #{tpu_custom_call.1} parent=47 // pred_check
          %p740 = pneg %p195
        $region54: #{tpu_custom_call.1} parent=47 // pred_check_branch
          %742 = sbr.rel (%p740) target = $region56
        $region55: #{tpu_custom_call.1} parent=47 // pred_region
          %s743 = smul.u32 4, %s25
          %s745 = ssub.s32 64, 64
          %746 = vsyncadd %s736, %s745
          %s747 = smul.addr %s743, 16
          %s748 = scalar_lea.hbm %s7, %s747
          %s750 = sshll.u32 %s739, 4
          %s751 = int_to_ptr.vmem [resolvable:$true] %s750
          %753 = dma.vmem_to_hbm [thread:$0]  %s751, 64, %s748, %s736
        $region56: #{tpu_custom_call.1} parent=47 // pred_fallthru
          _
      $region48: #{tpu_custom_call.1} parent=5 // pred_fallthru
        _
      %p754 = scmp.le.s32.totalorder 2, %s20
      // Predicated region
      $region57: #{tpu_custom_call.1} parent=5 // pred_check
        %p755 = pneg %p754
      $region58: #{tpu_custom_call.1} parent=5 // pred_check_branch
        %757 = sbr.rel (%p755) target = $region60
      $region59: #{tpu_custom_call.1} parent=5 // pred_region
        %s758 = ssub.s32 %s20, 2
        // Predicated region
        $region61: #{tpu_custom_call.1} parent=59 // pred_check
          %p759 = pneg %p201
        $region62: #{tpu_custom_call.1} parent=59 // pred_check_branch
          %761 = sbr.rel (%p759) target = $region64
        $region63: #{tpu_custom_call.1} parent=59 // pred_region
          %s762 = sand.u32 %s186, 1
          %s763 = scalar_lea.sflag [#allocation5], %s762
          %s764 = sand.u32 %s186, 1
          %s765 = smul.addr %s764, 4
          %s766 = scalar_lea.vmem [#allocation6], %s765
          %767 = dma.done %s763, 64
        $region64: #{tpu_custom_call.1} parent=59 // pred_fallthru
          _
      $region60: #{tpu_custom_call.1} parent=5 // pred_fallthru
        _
    $region6: #{tpu_custom_call.1} parent=1 // loop_footer
      %s24 = sadd.s32 1, %s20
    $region7: #{tpu_custom_call.1} parent=1 // loop_footer_branch
      %19 = sbr.rel target = $region3
    $region8: #{tpu_custom_call.1} parent=1 // loop_exit
      _
    %768 = vsyncpa [#allocation4], 1
    %s769 = scalar_lea.sflag [#allocation4], 1
    %770 = vsyncpa %s769, 1
    %771 = vsyncpa [#allocation5], 1
    %s772 = scalar_lea.sflag [#allocation5], 1
    %773 = vsyncpa %s772, 1

</llo_original>
